<compile_context>
chip_gen: v6e
topology: v6e:2x2x1
jax: 0.10.0
libtpu: 0.0.40
codegen_flags: <defaults>
</compile_context>

<pallas_src>
import functools

import jax
import jax.numpy as jnp
from jax.experimental import pallas as pl
from jax.experimental.pallas import tpu as pltpu

USE_BF16_MATMUL = False  # v5e-targeted review suggestion; keep f32 for exact semantics.


def _mm(a, b):
    if USE_BF16_MATMUL:
        a = a.astype(jnp.bfloat16)
        b = b.astype(jnp.bfloat16)
    return jnp.dot(a, b, preferred_element_type=jnp.float32)


def _lstm_fc_kernel(x_ref, wih_ref, whh_ref, b_ref, wfc_ref, bfc_ref, out_ref,
                    *, batch, steps, hidden):
    B, T, H = batch, steps, hidden

    # ---- Hoisted input projection for all timesteps (one MXU matmul). ----
    # Rows are time-major: row t*B + b  <->  (batch b, time t).
    gx = _mm(x_ref[...].astype(jnp.float32), wih_ref[...]) + b_ref[...]   # (T*B, 4H)

    whh = whh_ref[...]                                                    # (H, 4H), cols [i,f,o,g]

    h = jnp.zeros((B, H), jnp.float32)
    c = jnp.zeros((B, H), jnp.float32)
    hs = []

    # ---- Recurrence: fully unrolled (T is small & static). ----
    # Gate order (regrouped in the wrapper): i, f, o, g  ->  one grouped
    # sigmoid + one tanh per step; zero initial state (PyTorch default).
    for t in range(T):
        gates = gx[t * B:(t + 1) * B, :] + _mm(h, whh)                    # (B, 4H)
        sig = jax.nn.sigmoid(gates[:, :3 * H])                            # i, f, o
        g_g = jnp.tanh(gates[:, 3 * H:])                                  # g
        i_g = sig[:, 0 * H:1 * H]
        f_g = sig[:, 1 * H:2 * H]
        o_g = sig[:, 2 * H:3 * H]
        c = f_g * c + i_g * g_g
        h = o_g * jnp.tanh(c)
        hs.append(h)

    # ---- Deferred FC head: one matmul + one output writeback. ----
    hs_all = jnp.concatenate(hs, axis=0)                                  # (T*B, H) time-major
    y = _mm(hs_all, wfc_ref[...]) + bfc_ref[...]                          # (T*B, O)
    out_ref[...] = y.astype(out_ref.dtype)


def _regroup_gates(m):
    """Permute last axis from PyTorch gate order [i, f, g, o] to [i, f, o, g]."""
    i, f, g, o = jnp.split(m, 4, axis=-1)
    return jnp.concatenate([i, f, o, g], axis=-1)


@jax.jit
def lstm_fc_forward(x, w_ih, w_hh, b_ih, b_hh, w_fc, b_fc):
    """x: (B, T, input_size) f32 -> (B, T, output_size) f32.

    Matches nn.LSTM(num_layers=1, batch_first=True) with zero initial state,
    followed by nn.Linear applied to every timestep's hidden state.
    """
    B, T, I = x.shape
    fourH = w_ih.shape[0]
    H = fourH // 4
    O = w_fc.shape[0]

    # Weight / bias prep (wrapper-side): right-multiply form + gate regroup.
    wih_p = _regroup_gates(jnp.transpose(w_ih))                 # (I, 4H)
    whh_p = _regroup_gates(jnp.transpose(w_hh))                 # (H, 4H)
    bias_p = _regroup_gates((b_ih + b_hh).reshape(1, fourH))    # (1, 4H)
    wfc_t = jnp.transpose(w_fc)                                 # (H, O)
    bfc = b_fc.reshape(1, O)                                    # (1, O)

    # Flat, time-major 2-D input slab; reshapes/transposes stay in XLA land.
    x_tm = jnp.transpose(x, (1, 0, 2)).reshape(T * B, I)        # (T*B, I)

    vmem = pl.BlockSpec(memory_space=pltpu.MemorySpace.VMEM)
    kernel = functools.partial(_lstm_fc_kernel, batch=B, steps=T, hidden=H)

    y_tm = pl.pallas_call(
        kernel,
        out_shape=jax.ShapeDtypeStruct((T * B, O), x.dtype),
        in_specs=[vmem] * 6,
        out_specs=vmem,
    )(x_tm, wih_p, whh_p, bias_p, wfc_t, bfc)

    return jnp.transpose(y_tm.reshape(T, B, O), (1, 0, 2))      # (B, T, O)


def _reference_lstm_fc(x, w_ih, w_hh, b_ih, b_hh, w_fc, b_fc):
    """Pure-JAX reference matching PyTorch nn.LSTM + nn.Linear semantics."""
    B, T, I = x.shape
    H = w_hh.shape[1]

    def step(carry, x_t):
        h, c = carry
        gates = x_t @ w_ih.T + b_ih + h @ w_hh.T + b_hh
        i_g = jax.nn.sigmoid(gates[:, 0 * H:1 * H])
        f_g = jax.nn.sigmoid(gates[:, 1 * H:2 * H])
        g_g = jnp.tanh(gates[:, 2 * H:3 * H])
        o_g = jax.nn.sigmoid(gates[:, 3 * H:4 * H])
        c = f_g * c + i_g * g_g
        h = o_g * jnp.tanh(c)
        return (h, c), h

    h0 = jnp.zeros((B, H), jnp.float32)
    c0 = jnp.zeros((B, H), jnp.float32)
    _, hs = jax.lax.scan(step, (h0, c0), jnp.transpose(x, (1, 0, 2)))
    hs = jnp.transpose(hs, (1, 0, 2))                           # (B, T, H)
    return hs @ w_fc.T + b_fc


if __name__ == "__main__":
    # Small shapes consistent with the module.
    B, T = 2, 8
    input_size, hidden_size, output_size = 16, 32, 8

    key = jax.random.PRNGKey(0)
    keys = jax.random.split(key, 8)

    k_lstm = 1.0 / jnp.sqrt(hidden_size)
    k_fc = 1.0 / jnp.sqrt(hidden_size)

    # Deterministic parameter init (PyTorch default: U(-1/sqrt(H), 1/sqrt(H))).
    w_ih = jax.random.uniform(keys[0], (4 * hidden_size, input_size),
                              jnp.float32, -k_lstm, k_lstm)
    w_hh = jax.random.uniform(keys[1], (4 * hidden_size, hidden_size),
                              jnp.float32, -k_lstm, k_lstm)
    b_ih = jax.random.uniform(keys[2], (4 * hidden_size,),
                              jnp.float32, -k_lstm, k_lstm)
    b_hh = jax.random.uniform(keys[3], (4 * hidden_size,),
                              jnp.float32, -k_lstm, k_lstm)
    w_fc = jax.random.uniform(keys[4], (output_size, hidden_size),
                              jnp.float32, -k_fc, k_fc)
    b_fc = jax.random.uniform(keys[5], (output_size,),
                              jnp.float32, -k_fc, k_fc)

    x = jax.random.normal(keys[6], (B, T, input_size), jnp.float32)

    out = lstm_fc_forward(x, w_ih, w_hh, b_ih, b_hh, w_fc, b_fc)
    out = jax.block_until_ready(out)

    ref = _reference_lstm_fc(x, w_ih, w_hh, b_ih, b_hh, w_fc, b_fc)
    assert out.shape == (B, T, output_size)
    tol = 3e-2 if USE_BF16_MATMUL else 1e-5
    assert jnp.allclose(out, ref, atol=tol, rtol=tol)

    print("KERNEL_OK")
</pallas_src>

<mosaic_0001>
module attributes {stable_mosaic.version = 11 : i64} {
  func.func @_lstm_fc_kernel(%arg0: memref<16x16xf32, #tpu.memory_space<vmem>>, %arg1: memref<16x128xf32, #tpu.memory_space<vmem>>, %arg2: memref<32x128xf32, #tpu.memory_space<vmem>>, %arg3: memref<1x128xf32, #tpu.memory_space<vmem>>, %arg4: memref<32x8xf32, #tpu.memory_space<vmem>>, %arg5: memref<1x8xf32, #tpu.memory_space<vmem>>, %arg6: memref<16x8xf32, #tpu.memory_space<vmem>>) attributes {dimension_semantics = [], scalar_prefetch = 0 : i64, scratch_operands = 0 : i64, tpu.core_type = #tpu.core_type<tc>} {
    %c0 = arith.constant 0 : index
    %c0_0 = arith.constant 0 : index
    %0 = vector.load %arg0[%c0, %c0_0] : memref<16x16xf32, #tpu.memory_space<vmem>>, vector<16x16xf32>
    %c0_1 = arith.constant 0 : index
    %c0_2 = arith.constant 0 : index
    %1 = vector.load %arg1[%c0_1, %c0_2] : memref<16x128xf32, #tpu.memory_space<vmem>>, vector<16x128xf32>
    %cst = arith.constant dense<0.000000e+00> : vector<16x128xf32>
    %2 = tpu.matmul %0, %1, %cst {dimension_numbers = #tpu.dot_dimension_numbers<[1], [0], [0], [1], [0, 0, 1, 1], [], []>} : vector<16x16xf32>, vector<16x128xf32>, vector<16x128xf32> -> vector<16x128xf32>
    %c0_3 = arith.constant 0 : index
    %c0_4 = arith.constant 0 : index
    %3 = vector.load %arg3[%c0_3, %c0_4] : memref<1x128xf32, #tpu.memory_space<vmem>>, vector<1x128xf32>
    %4 = vector.broadcast %3 : vector<1x128xf32> to vector<16x128xf32>
    %5 = arith.addf %2, %4 : vector<16x128xf32>
    %c0_5 = arith.constant 0 : index
    %c0_6 = arith.constant 0 : index
    %6 = vector.load %arg2[%c0_5, %c0_6] : memref<32x128xf32, #tpu.memory_space<vmem>>, vector<32x128xf32>
    %cst_7 = arith.constant 0.000000e+00 : f32
    %7 = vector.broadcast %cst_7 : f32 to vector<2x32xf32>
    %cst_8 = arith.constant 0.000000e+00 : f32
    %8 = vector.broadcast %cst_8 : f32 to vector<2x32xf32>
    %9 = vector.extract_strided_slice %5 {offsets = [0, 0], sizes = [2, 128], strides = [1, 1]} : vector<16x128xf32> to vector<2x128xf32>
    %cst_9 = arith.constant dense<0.000000e+00> : vector<2x128xf32>
    %10 = tpu.matmul %7, %6, %cst_9 {dimension_numbers = #tpu.dot_dimension_numbers<[1], [0], [0], [1], [0, 0, 1, 1], [], []>} : vector<2x32xf32>, vector<32x128xf32>, vector<2x128xf32> -> vector<2x128xf32>
    %11 = arith.addf %9, %10 : vector<2x128xf32>
    %12 = vector.extract_strided_slice %11 {offsets = [0, 0], sizes = [2, 96], strides = [1, 1]} : vector<2x128xf32> to vector<2x96xf32>
    %13 = arith.negf %12 : vector<2x96xf32>
    %14 = math.exp %13 : vector<2x96xf32>
    %cst_10 = arith.constant 1.000000e+00 : f32
    %15 = vector.broadcast %cst_10 : f32 to vector<2x96xf32>
    %16 = arith.addf %15, %14 : vector<2x96xf32>
    %17 = arith.divf %15, %16 : vector<2x96xf32>
    %18 = vector.extract_strided_slice %11 {offsets = [0, 96], sizes = [2, 32], strides = [1, 1]} : vector<2x128xf32> to vector<2x32xf32>
    %19 = math.tanh %18 : vector<2x32xf32>
    %20 = vector.extract_strided_slice %17 {offsets = [0, 0], sizes = [2, 32], strides = [1, 1]} : vector<2x96xf32> to vector<2x32xf32>
    %21 = vector.extract_strided_slice %17 {offsets = [0, 32], sizes = [2, 32], strides = [1, 1]} : vector<2x96xf32> to vector<2x32xf32>
    %22 = vector.extract_strided_slice %17 {offsets = [0, 64], sizes = [2, 32], strides = [1, 1]} : vector<2x96xf32> to vector<2x32xf32>
    %23 = arith.mulf %21, %8 : vector<2x32xf32>
    %24 = arith.mulf %20, %19 : vector<2x32xf32>
    %25 = arith.addf %23, %24 : vector<2x32xf32>
    %26 = math.tanh %25 : vector<2x32xf32>
    %27 = arith.mulf %22, %26 : vector<2x32xf32>
    %28 = vector.extract_strided_slice %5 {offsets = [2, 0], sizes = [2, 128], strides = [1, 1]} : vector<16x128xf32> to vector<2x128xf32>
    %cst_11 = arith.constant dense<0.000000e+00> : vector<2x128xf32>
    %29 = tpu.matmul %27, %6, %cst_11 {dimension_numbers = #tpu.dot_dimension_numbers<[1], [0], [0], [1], [0, 0, 1, 1], [], []>} : vector<2x32xf32>, vector<32x128xf32>, vector<2x128xf32> -> vector<2x128xf32>
    %30 = arith.addf %28, %29 : vector<2x128xf32>
    %31 = vector.extract_strided_slice %30 {offsets = [0, 0], sizes = [2, 96], strides = [1, 1]} : vector<2x128xf32> to vector<2x96xf32>
    %32 = arith.negf %31 : vector<2x96xf32>
    %33 = math.exp %32 : vector<2x96xf32>
    %cst_12 = arith.constant 1.000000e+00 : f32
    %34 = vector.broadcast %cst_12 : f32 to vector<2x96xf32>
    %35 = arith.addf %34, %33 : vector<2x96xf32>
    %36 = arith.divf %34, %35 : vector<2x96xf32>
    %37 = vector.extract_strided_slice %30 {offsets = [0, 96], sizes = [2, 32], strides = [1, 1]} : vector<2x128xf32> to vector<2x32xf32>
    %38 = math.tanh %37 : vector<2x32xf32>
    %39 = vector.extract_strided_slice %36 {offsets = [0, 0], sizes = [2, 32], strides = [1, 1]} : vector<2x96xf32> to vector<2x32xf32>
    %40 = vector.extract_strided_slice %36 {offsets = [0, 32], sizes = [2, 32], strides = [1, 1]} : vector<2x96xf32> to vector<2x32xf32>
    %41 = vector.extract_strided_slice %36 {offsets = [0, 64], sizes = [2, 32], strides = [1, 1]} : vector<2x96xf32> to vector<2x32xf32>
    %42 = arith.mulf %40, %25 : vector<2x32xf32>
    %43 = arith.mulf %39, %38 : vector<2x32xf32>
    %44 = arith.addf %42, %43 : vector<2x32xf32>
    %45 = math.tanh %44 : vector<2x32xf32>
    %46 = arith.mulf %41, %45 : vector<2x32xf32>
    %47 = vector.extract_strided_slice %5 {offsets = [4, 0], sizes = [2, 128], strides = [1, 1]} : vector<16x128xf32> to vector<2x128xf32>
    %cst_13 = arith.constant dense<0.000000e+00> : vector<2x128xf32>
    %48 = tpu.matmul %46, %6, %cst_13 {dimension_numbers = #tpu.dot_dimension_numbers<[1], [0], [0], [1], [0, 0, 1, 1], [], []>} : vector<2x32xf32>, vector<32x128xf32>, vector<2x128xf32> -> vector<2x128xf32>
    %49 = arith.addf %47, %48 : vector<2x128xf32>
    %50 = vector.extract_strided_slice %49 {offsets = [0, 0], sizes = [2, 96], strides = [1, 1]} : vector<2x128xf32> to vector<2x96xf32>
    %51 = arith.negf %50 : vector<2x96xf32>
    %52 = math.exp %51 : vector<2x96xf32>
    %cst_14 = arith.constant 1.000000e+00 : f32
    %53 = vector.broadcast %cst_14 : f32 to vector<2x96xf32>
    %54 = arith.addf %53, %52 : vector<2x96xf32>
    %55 = arith.divf %53, %54 : vector<2x96xf32>
    %56 = vector.extract_strided_slice %49 {offsets = [0, 96], sizes = [2, 32], strides = [1, 1]} : vector<2x128xf32> to vector<2x32xf32>
    %57 = math.tanh %56 : vector<2x32xf32>
    %58 = vector.extract_strided_slice %55 {offsets = [0, 0], sizes = [2, 32], strides = [1, 1]} : vector<2x96xf32> to vector<2x32xf32>
    %59 = vector.extract_strided_slice %55 {offsets = [0, 32], sizes = [2, 32], strides = [1, 1]} : vector<2x96xf32> to vector<2x32xf32>
    %60 = vector.extract_strided_slice %55 {offsets = [0, 64], sizes = [2, 32], strides = [1, 1]} : vector<2x96xf32> to vector<2x32xf32>
    %61 = arith.mulf %59, %44 : vector<2x32xf32>
    %62 = arith.mulf %58, %57 : vector<2x32xf32>
    %63 = arith.addf %61, %62 : vector<2x32xf32>
    %64 = math.tanh %63 : vector<2x32xf32>
    %65 = arith.mulf %60, %64 : vector<2x32xf32>
    %66 = vector.extract_strided_slice %5 {offsets = [6, 0], sizes = [2, 128], strides = [1, 1]} : vector<16x128xf32> to vector<2x128xf32>
    %cst_15 = arith.constant dense<0.000000e+00> : vector<2x128xf32>
    %67 = tpu.matmul %65, %6, %cst_15 {dimension_numbers = #tpu.dot_dimension_numbers<[1], [0], [0], [1], [0, 0, 1, 1], [], []>} : vector<2x32xf32>, vector<32x128xf32>, vector<2x128xf32> -> vector<2x128xf32>
    %68 = arith.addf %66, %67 : vector<2x128xf32>
    %69 = vector.extract_strided_slice %68 {offsets = [0, 0], sizes = [2, 96], strides = [1, 1]} : vector<2x128xf32> to vector<2x96xf32>
    %70 = arith.negf %69 : vector<2x96xf32>
    %71 = math.exp %70 : vector<2x96xf32>
    %cst_16 = arith.constant 1.000000e+00 : f32
    %72 = vector.broadcast %cst_16 : f32 to vector<2x96xf32>
    %73 = arith.addf %72, %71 : vector<2x96xf32>
    %74 = arith.divf %72, %73 : vector<2x96xf32>
    %75 = vector.extract_strided_slice %68 {offsets = [0, 96], sizes = [2, 32], strides = [1, 1]} : vector<2x128xf32> to vector<2x32xf32>
    %76 = math.tanh %75 : vector<2x32xf32>
    %77 = vector.extract_strided_slice %74 {offsets = [0, 0], sizes = [2, 32], strides = [1, 1]} : vector<2x96xf32> to vector<2x32xf32>
    %78 = vector.extract_strided_slice %74 {offsets = [0, 32], sizes = [2, 32], strides = [1, 1]} : vector<2x96xf32> to vector<2x32xf32>
    %79 = vector.extract_strided_slice %74 {offsets = [0, 64], sizes = [2, 32], strides = [1, 1]} : vector<2x96xf32> to vector<2x32xf32>
    %80 = arith.mulf %78, %63 : vector<2x32xf32>
    %81 = arith.mulf %77, %76 : vector<2x32xf32>
    %82 = arith.addf %80, %81 : vector<2x32xf32>
    %83 = math.tanh %82 : vector<2x32xf32>
    %84 = arith.mulf %79, %83 : vector<2x32xf32>
    %85 = vector.extract_strided_slice %5 {offsets = [8, 0], sizes = [2, 128], strides = [1, 1]} : vector<16x128xf32> to vector<2x128xf32>
    %cst_17 = arith.constant dense<0.000000e+00> : vector<2x128xf32>
    %86 = tpu.matmul %84, %6, %cst_17 {dimension_numbers = #tpu.dot_dimension_numbers<[1], [0], [0], [1], [0, 0, 1, 1], [], []>} : vector<2x32xf32>, vector<32x128xf32>, vector<2x128xf32> -> vector<2x128xf32>
    %87 = arith.addf %85, %86 : vector<2x128xf32>
    %88 = vector.extract_strided_slice %87 {offsets = [0, 0], sizes = [2, 96], strides = [1, 1]} : vector<2x128xf32> to vector<2x96xf32>
    %89 = arith.negf %88 : vector<2x96xf32>
    %90 = math.exp %89 : vector<2x96xf32>
    %cst_18 = arith.constant 1.000000e+00 : f32
    %91 = vector.broadcast %cst_18 : f32 to vector<2x96xf32>
    %92 = arith.addf %91, %90 : vector<2x96xf32>
    %93 = arith.divf %91, %92 : vector<2x96xf32>
    %94 = vector.extract_strided_slice %87 {offsets = [0, 96], sizes = [2, 32], strides = [1, 1]} : vector<2x128xf32> to vector<2x32xf32>
    %95 = math.tanh %94 : vector<2x32xf32>
    %96 = vector.extract_strided_slice %93 {offsets = [0, 0], sizes = [2, 32], strides = [1, 1]} : vector<2x96xf32> to vector<2x32xf32>
    %97 = vector.extract_strided_slice %93 {offsets = [0, 32], sizes = [2, 32], strides = [1, 1]} : vector<2x96xf32> to vector<2x32xf32>
    %98 = vector.extract_strided_slice %93 {offsets = [0, 64], sizes = [2, 32], strides = [1, 1]} : vector<2x96xf32> to vector<2x32xf32>
    %99 = arith.mulf %97, %82 : vector<2x32xf32>
    %100 = arith.mulf %96, %95 : vector<2x32xf32>
    %101 = arith.addf %99, %100 : vector<2x32xf32>
    %102 = math.tanh %101 : vector<2x32xf32>
    %103 = arith.mulf %98, %102 : vector<2x32xf32>
    %104 = vector.extract_strided_slice %5 {offsets = [10, 0], sizes = [2, 128], strides = [1, 1]} : vector<16x128xf32> to vector<2x128xf32>
    %cst_19 = arith.constant dense<0.000000e+00> : vector<2x128xf32>
    %105 = tpu.matmul %103, %6, %cst_19 {dimension_numbers = #tpu.dot_dimension_numbers<[1], [0], [0], [1], [0, 0, 1, 1], [], []>} : vector<2x32xf32>, vector<32x128xf32>, vector<2x128xf32> -> vector<2x128xf32>
    %106 = arith.addf %104, %105 : vector<2x128xf32>
    %107 = vector.extract_strided_slice %106 {offsets = [0, 0], sizes = [2, 96], strides = [1, 1]} : vector<2x128xf32> to vector<2x96xf32>
    %108 = arith.negf %107 : vector<2x96xf32>
    %109 = math.exp %108 : vector<2x96xf32>
    %cst_20 = arith.constant 1.000000e+00 : f32
    %110 = vector.broadcast %cst_20 : f32 to vector<2x96xf32>
    %111 = arith.addf %110, %109 : vector<2x96xf32>
    %112 = arith.divf %110, %111 : vector<2x96xf32>
    %113 = vector.extract_strided_slice %106 {offsets = [0, 96], sizes = [2, 32], strides = [1, 1]} : vector<2x128xf32> to vector<2x32xf32>
    %114 = math.tanh %113 : vector<2x32xf32>
    %115 = vector.extract_strided_slice %112 {offsets = [0, 0], sizes = [2, 32], strides = [1, 1]} : vector<2x96xf32> to vector<2x32xf32>
    %116 = vector.extract_strided_slice %112 {offsets = [0, 32], sizes = [2, 32], strides = [1, 1]} : vector<2x96xf32> to vector<2x32xf32>
    %117 = vector.extract_strided_slice %112 {offsets = [0, 64], sizes = [2, 32], strides = [1, 1]} : vector<2x96xf32> to vector<2x32xf32>
    %118 = arith.mulf %116, %101 : vector<2x32xf32>
    %119 = arith.mulf %115, %114 : vector<2x32xf32>
    %120 = arith.addf %118, %119 : vector<2x32xf32>
    %121 = math.tanh %120 : vector<2x32xf32>
    %122 = arith.mulf %117, %121 : vector<2x32xf32>
    %123 = vector.extract_strided_slice %5 {offsets = [12, 0], sizes = [2, 128], strides = [1, 1]} : vector<16x128xf32> to vector<2x128xf32>
    %cst_21 = arith.constant dense<0.000000e+00> : vector<2x128xf32>
    %124 = tpu.matmul %122, %6, %cst_21 {dimension_numbers = #tpu.dot_dimension_numbers<[1], [0], [0], [1], [0, 0, 1, 1], [], []>} : vector<2x32xf32>, vector<32x128xf32>, vector<2x128xf32> -> vector<2x128xf32>
    %125 = arith.addf %123, %124 : vector<2x128xf32>
    %126 = vector.extract_strided_slice %125 {offsets = [0, 0], sizes = [2, 96], strides = [1, 1]} : vector<2x128xf32> to vector<2x96xf32>
    %127 = arith.negf %126 : vector<2x96xf32>
    %128 = math.exp %127 : vector<2x96xf32>
    %cst_22 = arith.constant 1.000000e+00 : f32
    %129 = vector.broadcast %cst_22 : f32 to vector<2x96xf32>
    %130 = arith.addf %129, %128 : vector<2x96xf32>
    %131 = arith.divf %129, %130 : vector<2x96xf32>
    %132 = vector.extract_strided_slice %125 {offsets = [0, 96], sizes = [2, 32], strides = [1, 1]} : vector<2x128xf32> to vector<2x32xf32>
    %133 = math.tanh %132 : vector<2x32xf32>
    %134 = vector.extract_strided_slice %131 {offsets = [0, 0], sizes = [2, 32], strides = [1, 1]} : vector<2x96xf32> to vector<2x32xf32>
    %135 = vector.extract_strided_slice %131 {offsets = [0, 32], sizes = [2, 32], strides = [1, 1]} : vector<2x96xf32> to vector<2x32xf32>
    %136 = vector.extract_strided_slice %131 {offsets = [0, 64], sizes = [2, 32], strides = [1, 1]} : vector<2x96xf32> to vector<2x32xf32>
    %137 = arith.mulf %135, %120 : vector<2x32xf32>
    %138 = arith.mulf %134, %133 : vector<2x32xf32>
    %139 = arith.addf %137, %138 : vector<2x32xf32>
    %140 = math.tanh %139 : vector<2x32xf32>
    %141 = arith.mulf %136, %140 : vector<2x32xf32>
    %142 = vector.extract_strided_slice %5 {offsets = [14, 0], sizes = [2, 128], strides = [1, 1]} : vector<16x128xf32> to vector<2x128xf32>
    %cst_23 = arith.constant dense<0.000000e+00> : vector<2x128xf32>
    %143 = tpu.matmul %141, %6, %cst_23 {dimension_numbers = #tpu.dot_dimension_numbers<[1], [0], [0], [1], [0, 0, 1, 1], [], []>} : vector<2x32xf32>, vector<32x128xf32>, vector<2x128xf32> -> vector<2x128xf32>
    %144 = arith.addf %142, %143 : vector<2x128xf32>
    %145 = vector.extract_strided_slice %144 {offsets = [0, 0], sizes = [2, 96], strides = [1, 1]} : vector<2x128xf32> to vector<2x96xf32>
    %146 = arith.negf %145 : vector<2x96xf32>
    %147 = math.exp %146 : vector<2x96xf32>
    %cst_24 = arith.constant 1.000000e+00 : f32
    %148 = vector.broadcast %cst_24 : f32 to vector<2x96xf32>
    %149 = arith.addf %148, %147 : vector<2x96xf32>
    %150 = arith.divf %148, %149 : vector<2x96xf32>
    %151 = vector.extract_strided_slice %144 {offsets = [0, 96], sizes = [2, 32], strides = [1, 1]} : vector<2x128xf32> to vector<2x32xf32>
    %152 = math.tanh %151 : vector<2x32xf32>
    %153 = vector.extract_strided_slice %150 {offsets = [0, 0], sizes = [2, 32], strides = [1, 1]} : vector<2x96xf32> to vector<2x32xf32>
    %154 = vector.extract_strided_slice %150 {offsets = [0, 32], sizes = [2, 32], strides = [1, 1]} : vector<2x96xf32> to vector<2x32xf32>
    %155 = vector.extract_strided_slice %150 {offsets = [0, 64], sizes = [2, 32], strides = [1, 1]} : vector<2x96xf32> to vector<2x32xf32>
    %156 = arith.mulf %154, %139 : vector<2x32xf32>
    %157 = arith.mulf %153, %152 : vector<2x32xf32>
    %158 = arith.addf %156, %157 : vector<2x32xf32>
    %159 = math.tanh %158 : vector<2x32xf32>
    %160 = arith.mulf %155, %159 : vector<2x32xf32>
    %161 = tpu.concatenate %27, %46, %65, %84, %103, %122, %141, %160 in 0 : vector<2x32xf32>, vector<2x32xf32>, vector<2x32xf32>, vector<2x32xf32>, vector<2x32xf32>, vector<2x32xf32>, vector<2x32xf32>, vector<2x32xf32> -> vector<16x32xf32>
    %c0_25 = arith.constant 0 : index
    %c0_26 = arith.constant 0 : index
    %162 = vector.load %arg4[%c0_25, %c0_26] : memref<32x8xf32, #tpu.memory_space<vmem>>, vector<32x8xf32>
    %cst_27 = arith.constant dense<0.000000e+00> : vector<16x8xf32>
    %163 = tpu.matmul %161, %162, %cst_27 {dimension_numbers = #tpu.dot_dimension_numbers<[1], [0], [0], [1], [0, 0, 1, 1], [], []>} : vector<16x32xf32>, vector<32x8xf32>, vector<16x8xf32> -> vector<16x8xf32>
    %c0_28 = arith.constant 0 : index
    %c0_29 = arith.constant 0 : index
    %164 = vector.load %arg5[%c0_28, %c0_29] : memref<1x8xf32, #tpu.memory_space<vmem>>, vector<1x8xf32>
    %165 = vector.broadcast %164 : vector<1x8xf32> to vector<16x8xf32>
    %166 = arith.addf %163, %165 : vector<16x8xf32>
    %c0_30 = arith.constant 0 : index
    %c0_31 = arith.constant 0 : index
    %167 = vector.load %arg6[%c0_30, %c0_31] : memref<16x8xf32, #tpu.memory_space<vmem>>, vector<16x8xf32>
    tpu.vector_store %arg6[%c0_30, %c0_31], %166 {strides = array<i32>} : memref<16x8xf32, #tpu.memory_space<vmem>>, vector<16x8xf32>,
    return
  }
}

</mosaic_0001>

<llo_original>
// kernel: lstm_fc_forward.1
$region0: #{lstm_fc_forward.1}
  #allocation0 [shape = 'u32[]', space=smem, size = 0x4, offset = 0x4, fixed_abs, tag = 'smem constant byte address 0x4 - core index']
  #allocation1 [shape = 'u32[144,128]{1,0:T(1,128)}', space=vmem, size = 0x12000, scoped, tag = 'internal scratch']
  %s0 = inlined_call_operand.vmem [shape: f32[16,16], index: 0, kind: input, shape index: {}]
  %s1 = inlined_call_operand.vmem [shape: f32[16,128], index: 1, kind: input, shape index: {}]
  %s2 = inlined_call_operand.vmem [shape: f32[32,128], index: 2, kind: input, shape index: {}]
  %s3 = inlined_call_operand.vmem [shape: f32[1,128], index: 3, kind: input, shape index: {}]
  %s4 = inlined_call_operand.vmem [shape: f32[32,8], index: 4, kind: input, shape index: {}]
  %s5 = inlined_call_operand.vmem [shape: f32[1,8], index: 5, kind: input, shape index: {}]
  %s6 = inlined_call_operand.vmem [shape: f32[16,8], index: 6, kind: output, shape index: {}]
  %s7 = sld [smem:[#allocation0]]
  $region34: #{lstm_fc_forward.1} parent=0
    _
  %s9 = ssub.s32 1, %s7
  %s10 = scalar_select 0, %s9, %s7
  // Predicated region
  $region2: #{lstm_fc_forward.1} parent=0 // pred_check
    _
  $region3: #{lstm_fc_forward.1} parent=0 // pred_check_branch
    %12 = sbr.rel (0) target = $region5
  $region4: #{lstm_fc_forward.1} parent=0 // pred_region
    _
  $region5: #{lstm_fc_forward.1} parent=0 // pred_fallthru
    _
  // Predicated region
  $region6: #{lstm_fc_forward.1} parent=0 // pred_check
    _
  $region7: #{lstm_fc_forward.1} parent=0 // pred_check_branch
    %14 = sbr.rel (0) target = $region9
  $region8: #{lstm_fc_forward.1} parent=0 // pred_region
    _
  $region9: #{lstm_fc_forward.1} parent=0 // pred_fallthru
    _
  // Predicated region
  $region10: #{lstm_fc_forward.1} parent=0 // pred_check
    _
  $region11: #{lstm_fc_forward.1} parent=0 // pred_check_branch
    %16 = sbr.rel (0) target = $region13
  $region12: #{lstm_fc_forward.1} parent=0 // pred_region
    _
  $region13: #{lstm_fc_forward.1} parent=0 // pred_fallthru
    _
  // Predicated region
  $region14: #{lstm_fc_forward.1} parent=0 // pred_check
    _
  $region15: #{lstm_fc_forward.1} parent=0 // pred_check_branch
    %18 = sbr.rel (0) target = $region17
  $region16: #{lstm_fc_forward.1} parent=0 // pred_region
    _
  $region17: #{lstm_fc_forward.1} parent=0 // pred_fallthru
    _
  // Predicated region
  $region18: #{lstm_fc_forward.1} parent=0 // pred_check
    _
  $region19: #{lstm_fc_forward.1} parent=0 // pred_check_branch
    %20 = sbr.rel (0) target = $region21
  $region20: #{lstm_fc_forward.1} parent=0 // pred_region
    _
  $region21: #{lstm_fc_forward.1} parent=0 // pred_fallthru
    _
  // Predicated region
  $region22: #{lstm_fc_forward.1} parent=0 // pred_check
    _
  $region23: #{lstm_fc_forward.1} parent=0 // pred_check_branch
    %22 = sbr.rel (0) target = $region25
  $region24: #{lstm_fc_forward.1} parent=0 // pred_region
    _
  $region25: #{lstm_fc_forward.1} parent=0 // pred_fallthru
    _
  %v23 = vld [vmem:[%s0] sm:$0xff]
  %v24 = vld [vmem:[%s0 + $0x8] sm:$0xff]
  %v25 = vld [vmem:[%s1] sm:$0xff]
  %v26 = vld [vmem:[%s1 + $0x8] sm:$0xff]
  %v27 = vld [vmem:[%s3] sm:$0x1]
  %v29 = vlaneseq
  %v30 = vshrl.u32 %v29, 7
  %v31 = vsub.s32 0, %v30
  %v32 = vrot.slane %v27, %v31
  %vm34 = vcmask 130048
  %v36 = vsel %vm34, %v23, 0
  %v39 = vsel %vm34, %v24, 0
  %41 = vmatprep.subr.mxu0 0.0
  %42 = vmatpush1.msra.mxu0 0.0
  %43 = vmatprep.subr.mxu0 0.0
  %44 = vmatpush1.msra.mxu0 0.0
  %45 = vmatprep.subr.mxu0 0.0
  %46 = vmatpush1.msra.mxu0 0.0
  %47 = vmatprep.subr.mxu0 0.0
  %48 = vmatpush1.msra.mxu0 0.0
  %49 = vmatprep.subr.mxu0 0.0
  %50 = vmatpush1.msra.mxu0 0.0
  %51 = vmatprep.subr.mxu0 0.0
  %52 = vmatpush1.msra.mxu0 0.0
  %53 = vmatprep.subr.mxu0 0.0
  %54 = vmatpush1.msra.mxu0 0.0
  %55 = vmatprep.subr.mxu0 0.0
  %56 = vmatpush1.msra.mxu0 0.0
  %57 = vmatprep.subr.mxu0 0.0
  %58 = vmatpush1.msra.mxu0 0.0
  %59 = vmatprep.subr.mxu0 0.0
  %60 = vmatpush1.msra.mxu0 0.0
  %61 = vmatprep.subr.mxu0 0.0
  %62 = vmatpush1.msra.mxu0 0.0
  %63 = vmatprep.subr.mxu0 0.0
  %64 = vmatpush1.msra.mxu0 0.0
  %65 = vmatprep.subr.mxu0 0.0
  %66 = vmatpush1.msra.mxu0 0.0
  %67 = vmatprep.subr.mxu0 0.0
  %68 = vmatpush1.msra.mxu0 0.0
  %69 = vmatprep.subr.mxu0 0.0
  %70 = vmatpush1.msra.mxu0 %v26
  %71 = vmatprep.subr.mxu0 0.0
  %72 = vmatpush1.msra.mxu0 %v25
  %73 = vmatprep.subr.mxu0 0.0
  %74 = vmatpush2.msra.mxu0 0.0
  %75 = vmatprep.subr.mxu0 0.0
  %76 = vmatpush2.msra.mxu0 0.0
  %77 = vmatprep.subr.mxu0 0.0
  %78 = vmatpush2.msra.mxu0 0.0
  %79 = vmatprep.subr.mxu0 0.0
  %80 = vmatpush2.msra.mxu0 0.0
  %81 = vmatprep.subr.mxu0 0.0
  %82 = vmatpush2.msra.mxu0 0.0
  %83 = vmatprep.subr.mxu0 0.0
  %84 = vmatpush2.msra.mxu0 0.0
  %85 = vmatprep.subr.mxu0 0.0
  %86 = vmatpush2.msra.mxu0 0.0
  %87 = vmatprep.subr.mxu0 0.0
  %88 = vmatpush2.msra.mxu0 0.0
  %89 = vmatprep.subr.mxu0 0.0
  %90 = vmatpush2.msra.mxu0 0.0
  %91 = vmatprep.subr.mxu0 0.0
  %92 = vmatpush2.msra.mxu0 0.0
  %93 = vmatprep.subr.mxu0 0.0
  %94 = vmatpush2.msra.mxu0 0.0
  %95 = vmatprep.subr.mxu0 0.0
  %96 = vmatpush2.msra.mxu0 0.0
  %97 = vmatprep.subr.mxu0 0.0
  %98 = vmatpush2.msra.mxu0 0.0
  %99 = vmatprep.subr.mxu0 0.0
  %100 = vmatpush2.msra.mxu0 0.0
  %101 = vmatprep.subr.mxu0 0.0
  %102 = vmatpush2.msra.mxu0 0.0
  %103 = vmatprep.subr.mxu0 0.0
  %104 = vmatpush2.msra.mxu0 0.0
  %105 = vmatprep.mubr.f32.mxu0 0.0
  %106 = vmatmul.mubr.f32.gmra.mxu0 %v36
  %v107 = vpop.f32.mrf.mxu0
  %v108 = vadd.f32 %v32, %v107
  %v109 = vpop.f32.mrf.mxu0
  %110 = vmatprep.mubr.f32.mxu0 0.0
  %111 = vmatmul.mubr.f32.gmra.mxu0 %v39
  %v112 = vpop.f32.mrf.mxu0
  %v113 = vadd.f32 %v32, %v112
  %v114 = vpop.f32.mrf.mxu0
  %115 = vdwg.mxu0
  %v116 = vld [vmem:[%s2] sm:$0xff]
  %v117 = vld [vmem:[%s2 + $0x8] sm:$0xff]
  %v118 = vld [vmem:[%s2 + $0x10] sm:$0xff]
  %v119 = vld [vmem:[%s2 + $0x18] sm:$0xff]
  %vm120 = vcmask 261120
  %v122 = vsel %vm120, 0.0, 0
  %124 = vmatprep.subr.mxu0 0.0
  %125 = vmatpush1.msra.mxu0 0.0
  %126 = vmatprep.subr.mxu0 0.0
  %127 = vmatpush1.msra.mxu0 0.0
  %128 = vmatprep.subr.mxu0 0.0
  %129 = vmatpush1.msra.mxu0 0.0
  %130 = vmatprep.subr.mxu0 0.0
  %131 = vmatpush1.msra.mxu0 0.0
  %132 = vmatprep.subr.mxu0 0.0
  %133 = vmatpush1.msra.mxu0 0.0
  %134 = vmatprep.subr.mxu0 0.0
  %135 = vmatpush1.msra.mxu0 0.0
  %136 = vmatprep.subr.mxu0 0.0
  %137 = vmatpush1.msra.mxu0 0.0
  %138 = vmatprep.subr.mxu0 0.0
  %139 = vmatpush1.msra.mxu0 0.0
  %140 = vmatprep.subr.mxu0 0.0
  %141 = vmatpush1.msra.mxu0 0.0
  %142 = vmatprep.subr.mxu0 0.0
  %143 = vmatpush1.msra.mxu0 0.0
  %144 = vmatprep.subr.mxu0 0.0
  %145 = vmatpush1.msra.mxu0 0.0
  %146 = vmatprep.subr.mxu0 0.0
  %147 = vmatpush1.msra.mxu0 0.0
  %148 = vmatprep.subr.mxu0 0.0
  %149 = vmatpush1.msra.mxu0 %v119
  %150 = vmatprep.subr.mxu0 0.0
  %151 = vmatpush1.msra.mxu0 %v118
  %152 = vmatprep.subr.mxu0 0.0
  %153 = vmatpush1.msra.mxu0 %v117
  %154 = vmatprep.subr.mxu0 0.0
  %155 = vmatpush1.msra.mxu0 %v116
  %156 = vmatprep.subr.mxu0 0.0
  %157 = vmatpush2.msra.mxu0 0.0
  %158 = vmatprep.subr.mxu0 0.0
  %159 = vmatpush2.msra.mxu0 0.0
  %160 = vmatprep.subr.mxu0 0.0
  %161 = vmatpush2.msra.mxu0 0.0
  %162 = vmatprep.subr.mxu0 0.0
  %163 = vmatpush2.msra.mxu0 0.0
  %164 = vmatprep.subr.mxu0 0.0
  %165 = vmatpush2.msra.mxu0 0.0
  %166 = vmatprep.subr.mxu0 0.0
  %167 = vmatpush2.msra.mxu0 0.0
  %168 = vmatprep.subr.mxu0 0.0
  %169 = vmatpush2.msra.mxu0 0.0
  %170 = vmatprep.subr.mxu0 0.0
  %171 = vmatpush2.msra.mxu0 0.0
  %172 = vmatprep.subr.mxu0 0.0
  %173 = vmatpush2.msra.mxu0 0.0
  %174 = vmatprep.subr.mxu0 0.0
  %175 = vmatpush2.msra.mxu0 0.0
  %176 = vmatprep.subr.mxu0 0.0
  %177 = vmatpush2.msra.mxu0 0.0
  %178 = vmatprep.subr.mxu0 0.0
  %179 = vmatpush2.msra.mxu0 0.0
  %180 = vmatprep.subr.mxu0 0.0
  %181 = vmatpush2.msra.mxu0 0.0
  %182 = vmatprep.subr.mxu0 0.0
  %183 = vmatpush2.msra.mxu0 0.0
  %184 = vmatprep.subr.mxu0 0.0
  %185 = vmatpush2.msra.mxu0 0.0
  %186 = vmatprep.subr.mxu0 0.0
  %187 = vmatpush2.msra.mxu0 0.0
  %188 = vmatprep.mubr.f32.mxu0 0.0
  %189 = vmatmul.mubr.f32.gmra.mxu0 %v122
  %v190 = vpop.f32.mrf.mxu0
  %v191 = vadd.f32 0.0, %v190
  %v192 = vpop.f32.mrf.mxu0
  %193 = vdwg.mxu0
  %v194 = vadd.f32 %v108, %v191
  %v195 = vxor.u32 %v194, 2147483648
  %v196 = vmul.f32 %v195, 1.442695
  %v197 = vpow.pop %v196
  %v198 = vadd.f32 %v197, 1.0
  %v199 = vrcp.pop %v198
  %v200 = vmul.f32 1.0, %v199
  %v201 = vtanh.pop %v194
  %v202 = vmul.f32 %v200, 0.0
  %204 = vrot.lane.b32.xlu0 %v201, 32
  %v205 = vpop.permute.xlu0 %204
  %v207 = vmul.f32 %v200, %v205
  %209 = vrot.lane.b32.xlu0 %v207, 32
  %v210 = vpop.permute.xlu0 %209
  %v212 = vadd.f32 %v202, %v210
  %v213 = vtanh.pop %v212
  %215 = vrot.lane.b32.xlu0 %v213, 32
  %v216 = vpop.permute.xlu0 %215
  %v218 = vmul.f32 %v200, %v216
  %220 = vrot.lane.b32.xlu0 %v218, 64
  %v221 = vpop.permute.xlu0 %220
  %v222 = vsel %vm120, %v221, 0
  %224 = vmatprep.subr.mxu0 0.0
  %225 = vmatpush1.msra.mxu0 0.0
  %226 = vmatprep.subr.mxu0 0.0
  %227 = vmatpush1.msra.mxu0 0.0
  %228 = vmatprep.subr.mxu0 0.0
  %229 = vmatpush1.msra.mxu0 0.0
  %230 = vmatprep.subr.mxu0 0.0
  %231 = vmatpush1.msra.mxu0 0.0
  %232 = vmatprep.subr.mxu0 0.0
  %233 = vmatpush1.msra.mxu0 0.0
  %234 = vmatprep.subr.mxu0 0.0
  %235 = vmatpush1.msra.mxu0 0.0
  %236 = vmatprep.subr.mxu0 0.0
  %237 = vmatpush1.msra.mxu0 0.0
  %238 = vmatprep.subr.mxu0 0.0
  %239 = vmatpush1.msra.mxu0 0.0
  %240 = vmatprep.subr.mxu0 0.0
  %241 = vmatpush1.msra.mxu0 0.0
  %242 = vmatprep.subr.mxu0 0.0
  %243 = vmatpush1.msra.mxu0 0.0
  %244 = vmatprep.subr.mxu0 0.0
  %245 = vmatpush1.msra.mxu0 0.0
  %246 = vmatprep.subr.mxu0 0.0
  %247 = vmatpush1.msra.mxu0 0.0
  %248 = vmatprep.subr.mxu0 0.0
  %249 = vmatpush1.msra.mxu0 %v119
  %250 = vmatprep.subr.mxu0 0.0
  %251 = vmatpush1.msra.mxu0 %v118
  %252 = vmatprep.subr.mxu0 0.0
  %253 = vmatpush1.msra.mxu0 %v117
  %254 = vmatprep.subr.mxu0 0.0
  %255 = vmatpush1.msra.mxu0 %v116
  %256 = vmatprep.subr.mxu0 0.0
  %257 = vmatpush2.msra.mxu0 0.0
  %258 = vmatprep.subr.mxu0 0.0
  %259 = vmatpush2.msra.mxu0 0.0
  %260 = vmatprep.subr.mxu0 0.0
  %261 = vmatpush2.msra.mxu0 0.0
  %262 = vmatprep.subr.mxu0 0.0
  %263 = vmatpush2.msra.mxu0 0.0
  %264 = vmatprep.subr.mxu0 0.0
  %265 = vmatpush2.msra.mxu0 0.0
  %266 = vmatprep.subr.mxu0 0.0
  %267 = vmatpush2.msra.mxu0 0.0
  %268 = vmatprep.subr.mxu0 0.0
  %269 = vmatpush2.msra.mxu0 0.0
  %270 = vmatprep.subr.mxu0 0.0
  %271 = vmatpush2.msra.mxu0 0.0
  %272 = vmatprep.subr.mxu0 0.0
  %273 = vmatpush2.msra.mxu0 0.0
  %274 = vmatprep.subr.mxu0 0.0
  %275 = vmatpush2.msra.mxu0 0.0
  %276 = vmatprep.subr.mxu0 0.0
  %277 = vmatpush2.msra.mxu0 0.0
  %278 = vmatprep.subr.mxu0 0.0
  %279 = vmatpush2.msra.mxu0 0.0
  %280 = vmatprep.subr.mxu0 0.0
  %281 = vmatpush2.msra.mxu0 0.0
  %282 = vmatprep.subr.mxu0 0.0
  %283 = vmatpush2.msra.mxu0 0.0
  %284 = vmatprep.subr.mxu0 0.0
  %285 = vmatpush2.msra.mxu0 0.0
  %286 = vmatprep.subr.mxu0 0.0
  %287 = vmatpush2.msra.mxu0 0.0
  %288 = vmatprep.mubr.f32.mxu0 0.0
  %289 = vmatmul.mubr.f32.gmra.mxu0 %v222
  %v290 = vpop.f32.mrf.mxu0
  %v291 = vadd.f32 0.0, %v290
  %v292 = vpop.f32.mrf.mxu0
  %293 = vdwg.mxu0
  %v295 = vrot.slane %v291, 6
  %v297 = vadd.f32 %v108, %v295
  %v298 = vxor.u32 %v297, 2147483648
  %v299 = vmul.f32 %v298, 1.442695
  %v300 = vpow.pop %v299
  %v301 = vadd.f32 %v300, 1.0
  %v302 = vrcp.pop %v301
  %v303 = vmul.f32 1.0, %v302
  %v304 = vtanh.pop %v297
  %v306 = vrot.slane %v212, 6
  %v308 = vmul.f32 %v303, %v306
  %310 = vrot.lane.b32.xlu0 %v304, 32
  %v311 = vpop.permute.xlu0 %310
  %v313 = vmul.f32 %v303, %v311
  %315 = vrot.lane.b32.xlu0 %v313, 32
  %v316 = vpop.permute.xlu0 %315
  %v318 = vadd.f32 %v308, %v316
  %v319 = vtanh.pop %v318
  %321 = vrot.lane.b32.xlu0 %v319, 32
  %v322 = vpop.permute.xlu0 %321
  %v324 = vmul.f32 %v303, %v322
  %v326 = vrot.slane %v324, 2
  %327 = vrot.lane.b32.xlu0 %v326, 64
  %v328 = vpop.permute.xlu0 %327
  %v329 = vsel %vm120, %v328, 0
  %331 = vmatprep.subr.mxu0 0.0
  %332 = vmatpush1.msra.mxu0 0.0
  %333 = vmatprep.subr.mxu0 0.0
  %334 = vmatpush1.msra.mxu0 0.0
  %335 = vmatprep.subr.mxu0 0.0
  %336 = vmatpush1.msra.mxu0 0.0
  %337 = vmatprep.subr.mxu0 0.0
  %338 = vmatpush1.msra.mxu0 0.0
  %339 = vmatprep.subr.mxu0 0.0
  %340 = vmatpush1.msra.mxu0 0.0
  %341 = vmatprep.subr.mxu0 0.0
  %342 = vmatpush1.msra.mxu0 0.0
  %343 = vmatprep.subr.mxu0 0.0
  %344 = vmatpush1.msra.mxu0 0.0
  %345 = vmatprep.subr.mxu0 0.0
  %346 = vmatpush1.msra.mxu0 0.0
  %347 = vmatprep.subr.mxu0 0.0
  %348 = vmatpush1.msra.mxu0 0.0
  %349 = vmatprep.subr.mxu0 0.0
  %350 = vmatpush1.msra.mxu0 0.0
  %351 = vmatprep.subr.mxu0 0.0
  %352 = vmatpush1.msra.mxu0 0.0
  %353 = vmatprep.subr.mxu0 0.0
  %354 = vmatpush1.msra.mxu0 0.0
  %355 = vmatprep.subr.mxu0 0.0
  %356 = vmatpush1.msra.mxu0 %v119
  %357 = vmatprep.subr.mxu0 0.0
  %358 = vmatpush1.msra.mxu0 %v118
  %359 = vmatprep.subr.mxu0 0.0
  %360 = vmatpush1.msra.mxu0 %v117
  %361 = vmatprep.subr.mxu0 0.0
  %362 = vmatpush1.msra.mxu0 %v116
  %363 = vmatprep.subr.mxu0 0.0
  %364 = vmatpush2.msra.mxu0 0.0
  %365 = vmatprep.subr.mxu0 0.0
  %366 = vmatpush2.msra.mxu0 0.0
  %367 = vmatprep.subr.mxu0 0.0
  %368 = vmatpush2.msra.mxu0 0.0
  %369 = vmatprep.subr.mxu0 0.0
  %370 = vmatpush2.msra.mxu0 0.0
  %371 = vmatprep.subr.mxu0 0.0
  %372 = vmatpush2.msra.mxu0 0.0
  %373 = vmatprep.subr.mxu0 0.0
  %374 = vmatpush2.msra.mxu0 0.0
  %375 = vmatprep.subr.mxu0 0.0
  %376 = vmatpush2.msra.mxu0 0.0
  %377 = vmatprep.subr.mxu0 0.0
  %378 = vmatpush2.msra.mxu0 0.0
  %379 = vmatprep.subr.mxu0 0.0
  %380 = vmatpush2.msra.mxu0 0.0
  %381 = vmatprep.subr.mxu0 0.0
  %382 = vmatpush2.msra.mxu0 0.0
  %383 = vmatprep.subr.mxu0 0.0
  %384 = vmatpush2.msra.mxu0 0.0
  %385 = vmatprep.subr.mxu0 0.0
  %386 = vmatpush2.msra.mxu0 0.0
  %387 = vmatprep.subr.mxu0 0.0
  %388 = vmatpush2.msra.mxu0 0.0
  %389 = vmatprep.subr.mxu0 0.0
  %390 = vmatpush2.msra.mxu0 0.0
  %391 = vmatprep.subr.mxu0 0.0
  %392 = vmatpush2.msra.mxu0 0.0
  %393 = vmatprep.subr.mxu0 0.0
  %394 = vmatpush2.msra.mxu0 0.0
  %395 = vmatprep.mubr.f32.mxu0 0.0
  %396 = vmatmul.mubr.f32.gmra.mxu0 %v329
  %v397 = vpop.f32.mrf.mxu0
  %v398 = vadd.f32 0.0, %v397
  %v399 = vpop.f32.mrf.mxu0
  %400 = vdwg.mxu0
  %v402 = vrot.slane %v398, 4
  %v404 = vadd.f32 %v108, %v402
  %v405 = vxor.u32 %v404, 2147483648
  %v406 = vmul.f32 %v405, 1.442695
  %v407 = vpow.pop %v406
  %v408 = vadd.f32 %v407, 1.0
  %v409 = vrcp.pop %v408
  %v410 = vmul.f32 1.0, %v409
  %v411 = vtanh.pop %v404
  %v413 = vrot.slane %v318, 6
  %v415 = vmul.f32 %v410, %v413
  %417 = vrot.lane.b32.xlu0 %v411, 32
  %v418 = vpop.permute.xlu0 %417
  %v420 = vmul.f32 %v410, %v418
  %422 = vrot.lane.b32.xlu0 %v420, 32
  %v423 = vpop.permute.xlu0 %422
  %v425 = vadd.f32 %v415, %v423
  %v426 = vtanh.pop %v425
  %428 = vrot.lane.b32.xlu0 %v426, 32
  %v429 = vpop.permute.xlu0 %428
  %v431 = vmul.f32 %v410, %v429
  %v433 = vrot.slane %v431, 4
  %434 = vrot.lane.b32.xlu0 %v433, 64
  %v435 = vpop.permute.xlu0 %434
  %v436 = vsel %vm120, %v435, 0
  %438 = vmatprep.subr.mxu0 0.0
  %439 = vmatpush1.msra.mxu0 0.0
  %440 = vmatprep.subr.mxu0 0.0
  %441 = vmatpush1.msra.mxu0 0.0
  %442 = vmatprep.subr.mxu0 0.0
  %443 = vmatpush1.msra.mxu0 0.0
  %444 = vmatprep.subr.mxu0 0.0
  %445 = vmatpush1.msra.mxu0 0.0
  %446 = vmatprep.subr.mxu0 0.0
  %447 = vmatpush1.msra.mxu0 0.0
  %448 = vmatprep.subr.mxu0 0.0
  %449 = vmatpush1.msra.mxu0 0.0
  %450 = vmatprep.subr.mxu0 0.0
  %451 = vmatpush1.msra.mxu0 0.0
  %452 = vmatprep.subr.mxu0 0.0
  %453 = vmatpush1.msra.mxu0 0.0
  %454 = vmatprep.subr.mxu0 0.0
  %455 = vmatpush1.msra.mxu0 0.0
  %456 = vmatprep.subr.mxu0 0.0
  %457 = vmatpush1.msra.mxu0 0.0
  %458 = vmatprep.subr.mxu0 0.0
  %459 = vmatpush1.msra.mxu0 0.0
  %460 = vmatprep.subr.mxu0 0.0
  %461 = vmatpush1.msra.mxu0 0.0
  %462 = vmatprep.subr.mxu0 0.0
  %463 = vmatpush1.msra.mxu0 %v119
  %464 = vmatprep.subr.mxu0 0.0
  %465 = vmatpush1.msra.mxu0 %v118
  %466 = vmatprep.subr.mxu0 0.0
  %467 = vmatpush1.msra.mxu0 %v117
  %468 = vmatprep.subr.mxu0 0.0
  %469 = vmatpush1.msra.mxu0 %v116
  %470 = vmatprep.subr.mxu0 0.0
  %471 = vmatpush2.msra.mxu0 0.0
  %472 = vmatprep.subr.mxu0 0.0
  %473 = vmatpush2.msra.mxu0 0.0
  %474 = vmatprep.subr.mxu0 0.0
  %475 = vmatpush2.msra.mxu0 0.0
  %476 = vmatprep.subr.mxu0 0.0
  %477 = vmatpush2.msra.mxu0 0.0
  %478 = vmatprep.subr.mxu0 0.0
  %479 = vmatpush2.msra.mxu0 0.0
  %480 = vmatprep.subr.mxu0 0.0
  %481 = vmatpush2.msra.mxu0 0.0
  %482 = vmatprep.subr.mxu0 0.0
  %483 = vmatpush2.msra.mxu0 0.0
  %484 = vmatprep.subr.mxu0 0.0
  %485 = vmatpush2.msra.mxu0 0.0
  %486 = vmatprep.subr.mxu0 0.0
  %487 = vmatpush2.msra.mxu0 0.0
  %488 = vmatprep.subr.mxu0 0.0
  %489 = vmatpush2.msra.mxu0 0.0
  %490 = vmatprep.subr.mxu0 0.0
  %491 = vmatpush2.msra.mxu0 0.0
  %492 = vmatprep.subr.mxu0 0.0
  %493 = vmatpush2.msra.mxu0 0.0
  %494 = vmatprep.subr.mxu0 0.0
  %495 = vmatpush2.msra.mxu0 0.0
  %496 = vmatprep.subr.mxu0 0.0
  %497 = vmatpush2.msra.mxu0 0.0
  %498 = vmatprep.subr.mxu0 0.0
  %499 = vmatpush2.msra.mxu0 0.0
  %500 = vmatprep.subr.mxu0 0.0
  %501 = vmatpush2.msra.mxu0 0.0
  %502 = vmatprep.mubr.f32.mxu0 0.0
  %503 = vmatmul.mubr.f32.gmra.mxu0 %v436
  %v504 = vpop.f32.mrf.mxu0
  %v505 = vadd.f32 0.0, %v504
  %v506 = vpop.f32.mrf.mxu0
  %507 = vdwg.mxu0
  %v509 = vrot.slane %v505, 2
  %v511 = vadd.f32 %v108, %v509
  %v512 = vxor.u32 %v511, 2147483648
  %v513 = vmul.f32 %v512, 1.442695
  %v514 = vpow.pop %v513
  %v515 = vadd.f32 %v514, 1.0
  %v516 = vrcp.pop %v515
  %v517 = vmul.f32 1.0, %v516
  %v518 = vtanh.pop %v511
  %v520 = vrot.slane %v425, 6
  %v522 = vmul.f32 %v517, %v520
  %524 = vrot.lane.b32.xlu0 %v518, 32
  %v525 = vpop.permute.xlu0 %524
  %v527 = vmul.f32 %v517, %v525
  %529 = vrot.lane.b32.xlu0 %v527, 32
  %v530 = vpop.permute.xlu0 %529
  %v532 = vadd.f32 %v522, %v530
  %v533 = vtanh.pop %v532
  %535 = vrot.lane.b32.xlu0 %v533, 32
  %v536 = vpop.permute.xlu0 %535
  %v538 = vmul.f32 %v517, %v536
  %v540 = vrot.slane %v538, 6
  %541 = vrot.lane.b32.xlu0 %v540, 64
  %v542 = vpop.permute.xlu0 %541
  %v543 = vsel %vm120, %v542, 0
  %545 = vmatprep.subr.mxu0 0.0
  %546 = vmatpush1.msra.mxu0 0.0
  %547 = vmatprep.subr.mxu0 0.0
  %548 = vmatpush1.msra.mxu0 0.0
  %549 = vmatprep.subr.mxu0 0.0
  %550 = vmatpush1.msra.mxu0 0.0
  %551 = vmatprep.subr.mxu0 0.0
  %552 = vmatpush1.msra.mxu0 0.0
  %553 = vmatprep.subr.mxu0 0.0
  %554 = vmatpush1.msra.mxu0 0.0
  %555 = vmatprep.subr.mxu0 0.0
  %556 = vmatpush1.msra.mxu0 0.0
  %557 = vmatprep.subr.mxu0 0.0
  %558 = vmatpush1.msra.mxu0 0.0
  %559 = vmatprep.subr.mxu0 0.0
  %560 = vmatpush1.msra.mxu0 0.0
  %561 = vmatprep.subr.mxu0 0.0
  %562 = vmatpush1.msra.mxu0 0.0
  %563 = vmatprep.subr.mxu0 0.0
  %564 = vmatpush1.msra.mxu0 0.0
  %565 = vmatprep.subr.mxu0 0.0
  %566 = vmatpush1.msra.mxu0 0.0
  %567 = vmatprep.subr.mxu0 0.0
  %568 = vmatpush1.msra.mxu0 0.0
  %569 = vmatprep.subr.mxu0 0.0
  %570 = vmatpush1.msra.mxu0 %v119
  %571 = vmatprep.subr.mxu0 0.0
  %572 = vmatpush1.msra.mxu0 %v118
  %573 = vmatprep.subr.mxu0 0.0
  %574 = vmatpush1.msra.mxu0 %v117
  %575 = vmatprep.subr.mxu0 0.0
  %576 = vmatpush1.msra.mxu0 %v116
  %577 = vmatprep.subr.mxu0 0.0
  %578 = vmatpush2.msra.mxu0 0.0
  %579 = vmatprep.subr.mxu0 0.0
  %580 = vmatpush2.msra.mxu0 0.0
  %581 = vmatprep.subr.mxu0 0.0
  %582 = vmatpush2.msra.mxu0 0.0
  %583 = vmatprep.subr.mxu0 0.0
  %584 = vmatpush2.msra.mxu0 0.0
  %585 = vmatprep.subr.mxu0 0.0
  %586 = vmatpush2.msra.mxu0 0.0
  %587 = vmatprep.subr.mxu0 0.0
  %588 = vmatpush2.msra.mxu0 0.0
  %589 = vmatprep.subr.mxu0 0.0
  %590 = vmatpush2.msra.mxu0 0.0
  %591 = vmatprep.subr.mxu0 0.0
  %592 = vmatpush2.msra.mxu0 0.0
  %593 = vmatprep.subr.mxu0 0.0
  %594 = vmatpush2.msra.mxu0 0.0
  %595 = vmatprep.subr.mxu0 0.0
  %596 = vmatpush2.msra.mxu0 0.0
  %597 = vmatprep.subr.mxu0 0.0
  %598 = vmatpush2.msra.mxu0 0.0
  %599 = vmatprep.subr.mxu0 0.0
  %600 = vmatpush2.msra.mxu0 0.0
  %601 = vmatprep.subr.mxu0 0.0
  %602 = vmatpush2.msra.mxu0 0.0
  %603 = vmatprep.subr.mxu0 0.0
  %604 = vmatpush2.msra.mxu0 0.0
  %605 = vmatprep.subr.mxu0 0.0
  %606 = vmatpush2.msra.mxu0 0.0
  %607 = vmatprep.subr.mxu0 0.0
  %608 = vmatpush2.msra.mxu0 0.0
  %609 = vmatprep.mubr.f32.mxu0 0.0
  %610 = vmatmul.mubr.f32.gmra.mxu0 %v543
  %v611 = vpop.f32.mrf.mxu0
  %v612 = vadd.f32 0.0, %v611
  %v613 = vpop.f32.mrf.mxu0
  %614 = vdwg.mxu0
  %v615 = vadd.f32 %v113, %v612
  %v616 = vxor.u32 %v615, 2147483648
  %v617 = vmul.f32 %v616, 1.442695
  %v618 = vpow.pop %v617
  %v619 = vadd.f32 %v618, 1.0
  %v620 = vrcp.pop %v619
  %v621 = vmul.f32 1.0, %v620
  %v622 = vtanh.pop %v615
  %v624 = vrot.slane %v532, 6
  %v626 = vmul.f32 %v621, %v624
  %628 = vrot.lane.b32.xlu0 %v622, 32
  %v629 = vpop.permute.xlu0 %628
  %v631 = vmul.f32 %v621, %v629
  %633 = vrot.lane.b32.xlu0 %v631, 32
  %v634 = vpop.permute.xlu0 %633
  %v636 = vadd.f32 %v626, %v634
  %v637 = vtanh.pop %v636
  %639 = vrot.lane.b32.xlu0 %v637, 32
  %v640 = vpop.permute.xlu0 %639
  %v642 = vmul.f32 %v621, %v640
  %644 = vrot.lane.b32.xlu0 %v642, 64
  %v645 = vpop.permute.xlu0 %644
  %v646 = vsel %vm120, %v645, 0
  %648 = vmatprep.subr.mxu0 0.0
  %649 = vmatpush1.msra.mxu0 0.0
  %650 = vmatprep.subr.mxu0 0.0
  %651 = vmatpush1.msra.mxu0 0.0
  %652 = vmatprep.subr.mxu0 0.0
  %653 = vmatpush1.msra.mxu0 0.0
  %654 = vmatprep.subr.mxu0 0.0
  %655 = vmatpush1.msra.mxu0 0.0
  %656 = vmatprep.subr.mxu0 0.0
  %657 = vmatpush1.msra.mxu0 0.0
  %658 = vmatprep.subr.mxu0 0.0
  %659 = vmatpush1.msra.mxu0 0.0
  %660 = vmatprep.subr.mxu0 0.0
  %661 = vmatpush1.msra.mxu0 0.0
  %662 = vmatprep.subr.mxu0 0.0
  %663 = vmatpush1.msra.mxu0 0.0
  %664 = vmatprep.subr.mxu0 0.0
  %665 = vmatpush1.msra.mxu0 0.0
  %666 = vmatprep.subr.mxu0 0.0
  %667 = vmatpush1.msra.mxu0 0.0
  %668 = vmatprep.subr.mxu0 0.0
  %669 = vmatpush1.msra.mxu0 0.0
  %670 = vmatprep.subr.mxu0 0.0
  %671 = vmatpush1.msra.mxu0 0.0
  %672 = vmatprep.subr.mxu0 0.0
  %673 = vmatpush1.msra.mxu0 %v119
  %674 = vmatprep.subr.mxu0 0.0
  %675 = vmatpush1.msra.mxu0 %v118
  %676 = vmatprep.subr.mxu0 0.0
  %677 = vmatpush1.msra.mxu0 %v117
  %678 = vmatprep.subr.mxu0 0.0
  %679 = vmatpush1.msra.mxu0 %v116
  %680 = vmatprep.subr.mxu0 0.0
  %681 = vmatpush2.msra.mxu0 0.0
  %682 = vmatprep.subr.mxu0 0.0
  %683 = vmatpush2.msra.mxu0 0.0
  %684 = vmatprep.subr.mxu0 0.0
  %685 = vmatpush2.msra.mxu0 0.0
  %686 = vmatprep.subr.mxu0 0.0
  %687 = vmatpush2.msra.mxu0 0.0
  %688 = vmatprep.subr.mxu0 0.0
  %689 = vmatpush2.msra.mxu0 0.0
  %690 = vmatprep.subr.mxu0 0.0
  %691 = vmatpush2.msra.mxu0 0.0
  %692 = vmatprep.subr.mxu0 0.0
  %693 = vmatpush2.msra.mxu0 0.0
  %694 = vmatprep.subr.mxu0 0.0
  %695 = vmatpush2.msra.mxu0 0.0
  %696 = vmatprep.subr.mxu0 0.0
  %697 = vmatpush2.msra.mxu0 0.0
  %698 = vmatprep.subr.mxu0 0.0
  %699 = vmatpush2.msra.mxu0 0.0
  %700 = vmatprep.subr.mxu0 0.0
  %701 = vmatpush2.msra.mxu0 0.0
  %702 = vmatprep.subr.mxu0 0.0
  %703 = vmatpush2.msra.mxu0 0.0
  %704 = vmatprep.subr.mxu0 0.0
  %705 = vmatpush2.msra.mxu0 0.0
  %706 = vmatprep.subr.mxu0 0.0
  %707 = vmatpush2.msra.mxu0 0.0
  %708 = vmatprep.subr.mxu0 0.0
  %709 = vmatpush2.msra.mxu0 0.0
  %710 = vmatprep.subr.mxu0 0.0
  %711 = vmatpush2.msra.mxu0 0.0
  %712 = vmatprep.mubr.f32.mxu0 0.0
  %713 = vmatmul.mubr.f32.gmra.mxu0 %v646
  %v714 = vpop.f32.mrf.mxu0
  %v715 = vadd.f32 0.0, %v714
  %v716 = vpop.f32.mrf.mxu0
  %717 = vdwg.mxu0
  %v719 = vrot.slane %v715, 6
  %v721 = vadd.f32 %v113, %v719
  %v722 = vxor.u32 %v721, 2147483648
  %v723 = vmul.f32 %v722, 1.442695
  %v724 = vpow.pop %v723
  %v725 = vadd.f32 %v724, 1.0
  %v726 = vrcp.pop %v725
  %v727 = vmul.f32 1.0, %v726
  %v728 = vtanh.pop %v721
  %v730 = vrot.slane %v636, 6
  %v732 = vmul.f32 %v727, %v730
  %734 = vrot.lane.b32.xlu0 %v728, 32
  %v735 = vpop.permute.xlu0 %734
  %v737 = vmul.f32 %v727, %v735
  %739 = vrot.lane.b32.xlu0 %v737, 32
  %v740 = vpop.permute.xlu0 %739
  %v742 = vadd.f32 %v732, %v740
  %v743 = vtanh.pop %v742
  %745 = vrot.lane.b32.xlu0 %v743, 32
  %v746 = vpop.permute.xlu0 %745
  %v748 = vmul.f32 %v727, %v746
  %v750 = vrot.slane %v748, 2
  %751 = vrot.lane.b32.xlu0 %v750, 64
  %v752 = vpop.permute.xlu0 %751
  %v753 = vsel %vm120, %v752, 0
  %755 = vmatprep.subr.mxu0 0.0
  %756 = vmatpush1.msra.mxu0 0.0
  %757 = vmatprep.subr.mxu0 0.0
  %758 = vmatpush1.msra.mxu0 0.0
  %759 = vmatprep.subr.mxu0 0.0
  %760 = vmatpush1.msra.mxu0 0.0
  %761 = vmatprep.subr.mxu0 0.0
  %762 = vmatpush1.msra.mxu0 0.0
  %763 = vmatprep.subr.mxu0 0.0
  %764 = vmatpush1.msra.mxu0 0.0
  %765 = vmatprep.subr.mxu0 0.0
  %766 = vmatpush1.msra.mxu0 0.0
  %767 = vmatprep.subr.mxu0 0.0
  %768 = vmatpush1.msra.mxu0 0.0
  %769 = vmatprep.subr.mxu0 0.0
  %770 = vmatpush1.msra.mxu0 0.0
  %771 = vmatprep.subr.mxu0 0.0
  %772 = vmatpush1.msra.mxu0 0.0
  %773 = vmatprep.subr.mxu0 0.0
  %774 = vmatpush1.msra.mxu0 0.0
  %775 = vmatprep.subr.mxu0 0.0
  %776 = vmatpush1.msra.mxu0 0.0
  %777 = vmatprep.subr.mxu0 0.0
  %778 = vmatpush1.msra.mxu0 0.0
  %779 = vmatprep.subr.mxu0 0.0
  %780 = vmatpush1.msra.mxu0 %v119
  %781 = vmatprep.subr.mxu0 0.0
  %782 = vmatpush1.msra.mxu0 %v118
  %783 = vmatprep.subr.mxu0 0.0
  %784 = vmatpush1.msra.mxu0 %v117
  %785 = vmatprep.subr.mxu0 0.0
  %786 = vmatpush1.msra.mxu0 %v116
  %787 = vmatprep.subr.mxu0 0.0
  %788 = vmatpush2.msra.mxu0 0.0
  %789 = vmatprep.subr.mxu0 0.0
  %790 = vmatpush2.msra.mxu0 0.0
  %791 = vmatprep.subr.mxu0 0.0
  %792 = vmatpush2.msra.mxu0 0.0
  %793 = vmatprep.subr.mxu0 0.0
  %794 = vmatpush2.msra.mxu0 0.0
  %795 = vmatprep.subr.mxu0 0.0
  %796 = vmatpush2.msra.mxu0 0.0
  %797 = vmatprep.subr.mxu0 0.0
  %798 = vmatpush2.msra.mxu0 0.0
  %799 = vmatprep.subr.mxu0 0.0
  %800 = vmatpush2.msra.mxu0 0.0
  %801 = vmatprep.subr.mxu0 0.0
  %802 = vmatpush2.msra.mxu0 0.0
  %803 = vmatprep.subr.mxu0 0.0
  %804 = vmatpush2.msra.mxu0 0.0
  %805 = vmatprep.subr.mxu0 0.0
  %806 = vmatpush2.msra.mxu0 0.0
  %807 = vmatprep.subr.mxu0 0.0
  %808 = vmatpush2.msra.mxu0 0.0
  %809 = vmatprep.subr.mxu0 0.0
  %810 = vmatpush2.msra.mxu0 0.0
  %811 = vmatprep.subr.mxu0 0.0
  %812 = vmatpush2.msra.mxu0 0.0
  %813 = vmatprep.subr.mxu0 0.0
  %814 = vmatpush2.msra.mxu0 0.0
  %815 = vmatprep.subr.mxu0 0.0
  %816 = vmatpush2.msra.mxu0 0.0
  %817 = vmatprep.subr.mxu0 0.0
  %818 = vmatpush2.msra.mxu0 0.0
  %819 = vmatprep.mubr.f32.mxu0 0.0
  %820 = vmatmul.mubr.f32.gmra.mxu0 %v753
  %v821 = vpop.f32.mrf.mxu0
  %v822 = vadd.f32 0.0, %v821
  %v823 = vpop.f32.mrf.mxu0
  %824 = vdwg.mxu0
  %v826 = vrot.slane %v822, 4
  %v828 = vadd.f32 %v113, %v826
  %v829 = vxor.u32 %v828, 2147483648
  %v830 = vmul.f32 %v829, 1.442695
  %v831 = vpow.pop %v830
  %v832 = vadd.f32 %v831, 1.0
  %v833 = vrcp.pop %v832
  %v834 = vmul.f32 1.0, %v833
  %v835 = vtanh.pop %v828
  %v837 = vrot.slane %v742, 6
  %v839 = vmul.f32 %v834, %v837
  %841 = vrot.lane.b32.xlu0 %v835, 32
  %v842 = vpop.permute.xlu0 %841
  %v844 = vmul.f32 %v834, %v842
  %846 = vrot.lane.b32.xlu0 %v844, 32
  %v847 = vpop.permute.xlu0 %846
  %v849 = vadd.f32 %v839, %v847
  %v850 = vtanh.pop %v849
  %852 = vrot.lane.b32.xlu0 %v850, 32
  %v853 = vpop.permute.xlu0 %852
  %v855 = vmul.f32 %v834, %v853
  %v857 = vrot.slane %v855, 4
  %858 = vrot.lane.b32.xlu0 %v857, 64
  %v859 = vpop.permute.xlu0 %858
  %v860 = vsel %vm120, %v859, 0
  %862 = vmatprep.subr.mxu0 0.0
  %863 = vmatpush1.msra.mxu0 0.0
  %864 = vmatprep.subr.mxu0 0.0
  %865 = vmatpush1.msra.mxu0 0.0
  %866 = vmatprep.subr.mxu0 0.0
  %867 = vmatpush1.msra.mxu0 0.0
  %868 = vmatprep.subr.mxu0 0.0
  %869 = vmatpush1.msra.mxu0 0.0
  %870 = vmatprep.subr.mxu0 0.0
  %871 = vmatpush1.msra.mxu0 0.0
  %872 = vmatprep.subr.mxu0 0.0
  %873 = vmatpush1.msra.mxu0 0.0
  %874 = vmatprep.subr.mxu0 0.0
  %875 = vmatpush1.msra.mxu0 0.0
  %876 = vmatprep.subr.mxu0 0.0
  %877 = vmatpush1.msra.mxu0 0.0
  %878 = vmatprep.subr.mxu0 0.0
  %879 = vmatpush1.msra.mxu0 0.0
  %880 = vmatprep.subr.mxu0 0.0
  %881 = vmatpush1.msra.mxu0 0.0
  %882 = vmatprep.subr.mxu0 0.0
  %883 = vmatpush1.msra.mxu0 0.0
  %884 = vmatprep.subr.mxu0 0.0
  %885 = vmatpush1.msra.mxu0 0.0
  %886 = vmatprep.subr.mxu0 0.0
  %887 = vmatpush1.msra.mxu0 %v119
  %888 = vmatprep.subr.mxu0 0.0
  %889 = vmatpush1.msra.mxu0 %v118
  %890 = vmatprep.subr.mxu0 0.0
  %891 = vmatpush1.msra.mxu0 %v117
  %892 = vmatprep.subr.mxu0 0.0
  %893 = vmatpush1.msra.mxu0 %v116
  %894 = vmatprep.subr.mxu0 0.0
  %895 = vmatpush2.msra.mxu0 0.0
  %896 = vmatprep.subr.mxu0 0.0
  %897 = vmatpush2.msra.mxu0 0.0
  %898 = vmatprep.subr.mxu0 0.0
  %899 = vmatpush2.msra.mxu0 0.0
  %900 = vmatprep.subr.mxu0 0.0
  %901 = vmatpush2.msra.mxu0 0.0
  %902 = vmatprep.subr.mxu0 0.0
  %903 = vmatpush2.msra.mxu0 0.0
  %904 = vmatprep.subr.mxu0 0.0
  %905 = vmatpush2.msra.mxu0 0.0
  %906 = vmatprep.subr.mxu0 0.0
  %907 = vmatpush2.msra.mxu0 0.0
  %908 = vmatprep.subr.mxu0 0.0
  %909 = vmatpush2.msra.mxu0 0.0
  %910 = vmatprep.subr.mxu0 0.0
  %911 = vmatpush2.msra.mxu0 0.0
  %912 = vmatprep.subr.mxu0 0.0
  %913 = vmatpush2.msra.mxu0 0.0
  %914 = vmatprep.subr.mxu0 0.0
  %915 = vmatpush2.msra.mxu0 0.0
  %916 = vmatprep.subr.mxu0 0.0
  %917 = vmatpush2.msra.mxu0 0.0
  %918 = vmatprep.subr.mxu0 0.0
  %919 = vmatpush2.msra.mxu0 0.0
  %920 = vmatprep.subr.mxu0 0.0
  %921 = vmatpush2.msra.mxu0 0.0
  %922 = vmatprep.subr.mxu0 0.0
  %923 = vmatpush2.msra.mxu0 0.0
  %924 = vmatprep.subr.mxu0 0.0
  %925 = vmatpush2.msra.mxu0 0.0
  %926 = vmatprep.mubr.f32.mxu0 0.0
  %927 = vmatmul.mubr.f32.gmra.mxu0 %v860
  %v928 = vpop.f32.mrf.mxu0
  %v929 = vadd.f32 0.0, %v928
  %v930 = vpop.f32.mrf.mxu0
  %931 = vdwg.mxu0
  %v933 = vrot.slane %v929, 2
  %v935 = vadd.f32 %v113, %v933
  %v936 = vxor.u32 %v935, 2147483648
  %v937 = vmul.f32 %v936, 1.442695
  %v938 = vpow.pop %v937
  %v939 = vadd.f32 %v938, 1.0
  %v940 = vrcp.pop %v939
  %v941 = vmul.f32 1.0, %v940
  %v942 = vtanh.pop %v935
  %v944 = vrot.slane %v849, 6
  %v946 = vmul.f32 %v941, %v944
  %948 = vrot.lane.b32.xlu0 %v942, 32
  %v949 = vpop.permute.xlu0 %948
  %v951 = vmul.f32 %v941, %v949
  %953 = vrot.lane.b32.xlu0 %v951, 32
  %v954 = vpop.permute.xlu0 %953
  %v956 = vadd.f32 %v946, %v954
  %v957 = vtanh.pop %v956
  %959 = vrot.lane.b32.xlu0 %v957, 32
  %v960 = vpop.permute.xlu0 %959
  %v962 = vmul.f32 %v941, %v960
  %vm963 = vcmask 1041408
  %v964 = vsel %vm963, %v218, %v324
  %vm965 = vcmask 1043456
  %v966 = vsel %vm965, %v964, %v431
  %vm967 = vcmask 1045504
  %v968 = vsel %vm967, %v966, %v538
  %v969 = vsel %vm963, %v642, %v748
  %v970 = vsel %vm965, %v969, %v855
  %v971 = vsel %vm967, %v970, %v962
  %v972 = vld [vmem:[%s4] sm:$0xff]
  %v973 = vld [vmem:[%s4 + $0x8] sm:$0xff]
  %v974 = vld [vmem:[%s4 + $0x10] sm:$0xff]
  %v975 = vld [vmem:[%s4 + $0x18] sm:$0xff]
  %v976 = vld [vmem:[%s5] sm:$0x1]
  %v978 = vlaneseq
  %v979 = vshrl.u32 %v978, 7
  %v980 = vsub.s32 0, %v979
  %v981 = vrot.slane %v976, %v980
  %985 = vrot.lane.b32.xlu0 %v968, 64
  %v986 = vpop.permute.xlu0 %985
  %987 = vrot.lane.b32.xlu0 %v971, 64
  %v988 = vpop.permute.xlu0 %987
  %v989 = vsel %vm120, %v986, 0
  %v991 = vsel %vm120, %v988, 0
  %993 = vmatprep.subr.mxu0 0.0
  %994 = vmatpush1.msra.mxu0 0.0
  %995 = vmatprep.subr.mxu0 0.0
  %996 = vmatpush1.msra.mxu0 0.0
  %997 = vmatprep.subr.mxu0 0.0
  %998 = vmatpush1.msra.mxu0 0.0
  %999 = vmatprep.subr.mxu0 0.0
  %1000 = vmatpush1.msra.mxu0 0.0
  %1001 = vmatprep.subr.mxu0 0.0
  %1002 = vmatpush1.msra.mxu0 0.0
  %1003 = vmatprep.subr.mxu0 0.0
  %1004 = vmatpush1.msra.mxu0 0.0
  %1005 = vmatprep.subr.mxu0 0.0
  %1006 = vmatpush1.msra.mxu0 0.0
  %1007 = vmatprep.subr.mxu0 0.0
  %1008 = vmatpush1.msra.mxu0 0.0
  %1009 = vmatprep.subr.mxu0 0.0
  %1010 = vmatpush1.msra.mxu0 0.0
  %1011 = vmatprep.subr.mxu0 0.0
  %1012 = vmatpush1.msra.mxu0 0.0
  %1013 = vmatprep.subr.mxu0 0.0
  %1014 = vmatpush1.msra.mxu0 0.0
  %1015 = vmatprep.subr.mxu0 0.0
  %1016 = vmatpush1.msra.mxu0 0.0
  %1017 = vmatprep.subr.mxu0 0.0
  %1018 = vmatpush1.msra.mxu0 %v975
  %1019 = vmatprep.subr.mxu0 0.0
  %1020 = vmatpush1.msra.mxu0 %v974
  %1021 = vmatprep.subr.mxu0 0.0
  %1022 = vmatpush1.msra.mxu0 %v973
  %1023 = vmatprep.subr.mxu0 0.0
  %1024 = vmatpush1.msra.mxu0 %v972
  %1025 = vmatprep.subr.mxu0 0.0
  %1026 = vmatpush2.msra.mxu0 0.0
  %1027 = vmatprep.subr.mxu0 0.0
  %1028 = vmatpush2.msra.mxu0 0.0
  %1029 = vmatprep.subr.mxu0 0.0
  %1030 = vmatpush2.msra.mxu0 0.0
  %1031 = vmatprep.subr.mxu0 0.0
  %1032 = vmatpush2.msra.mxu0 0.0
  %1033 = vmatprep.subr.mxu0 0.0
  %1034 = vmatpush2.msra.mxu0 0.0
  %1035 = vmatprep.subr.mxu0 0.0
  %1036 = vmatpush2.msra.mxu0 0.0
  %1037 = vmatprep.subr.mxu0 0.0
  %1038 = vmatpush2.msra.mxu0 0.0
  %1039 = vmatprep.subr.mxu0 0.0
  %1040 = vmatpush2.msra.mxu0 0.0
  %1041 = vmatprep.subr.mxu0 0.0
  %1042 = vmatpush2.msra.mxu0 0.0
  %1043 = vmatprep.subr.mxu0 0.0
  %1044 = vmatpush2.msra.mxu0 0.0
  %1045 = vmatprep.subr.mxu0 0.0
  %1046 = vmatpush2.msra.mxu0 0.0
  %1047 = vmatprep.subr.mxu0 0.0
  %1048 = vmatpush2.msra.mxu0 0.0
  %1049 = vmatprep.subr.mxu0 0.0
  %1050 = vmatpush2.msra.mxu0 0.0
  %1051 = vmatprep.subr.mxu0 0.0
  %1052 = vmatpush2.msra.mxu0 0.0
  %1053 = vmatprep.subr.mxu0 0.0
  %1054 = vmatpush2.msra.mxu0 0.0
  %1055 = vmatprep.subr.mxu0 0.0
  %1056 = vmatpush2.msra.mxu0 0.0
  %1057 = vmatprep.mubr.f32.mxu0 0.0
  %1058 = vmatmul.mubr.f32.gmra.mxu0 %v989
  %v1059 = vpop.f32.mrf.mxu0
  %v1060 = vadd.f32 %v981, %v1059
  %v1061 = vpop.f32.mrf.mxu0
  %1062 = vmatprep.mubr.f32.mxu0 0.0
  %1063 = vmatmul.mubr.f32.gmra.mxu0 %v991
  %v1064 = vpop.f32.mrf.mxu0
  %v1065 = vadd.f32 %v981, %v1064
  %v1066 = vpop.f32.mrf.mxu0
  %1067 = vdwg.mxu0
  %vm1068 = vcmask 64512
  %1069 = vst.msk [vmem:[%s6] sm:$0xff] %vm1068, %v1060
  %1070 = vst.msk [vmem:[%s6 + $0x8] sm:$0xff] %vm1068, %v1065
  // Predicated region
  $region26: #{lstm_fc_forward.1} parent=0 // pred_check
    _
  $region27: #{lstm_fc_forward.1} parent=0 // pred_check_branch
    %1072 = sbr.rel (0) target = $region29
  $region28: #{lstm_fc_forward.1} parent=0 // pred_region
    _
  $region29: #{lstm_fc_forward.1} parent=0 // pred_fallthru
    _
  // Predicated region
  $region30: #{lstm_fc_forward.1} parent=0 // pred_check
    _
  $region31: #{lstm_fc_forward.1} parent=0 // pred_check_branch
    %1074 = sbr.rel (0) target = $region33
  $region32: #{lstm_fc_forward.1} parent=0 // pred_region
    _
  $region33: #{lstm_fc_forward.1} parent=0 // pred_fallthru
    _

</llo_original>
